<compile_context>
chip_gen: v5e
topology: v5e:2x2
jax: 0.10.0
libtpu: 0.0.40
codegen_flags: <defaults>
</compile_context>

<pallas_src>
import jax
import jax.numpy as jnp
from jax import lax
from jax.experimental import pallas as pl
from jax.experimental.pallas import tpu as pltpu


_QMAX = 127.0   # int8, signed, narrow_range=False
_QMIN = -128.0

_NSPLIT = 2                       # leading 'parallel' axis for v7x dual-TC sharding
_TH_CAP = 512                     # output-block lane dim: keep large & lane-dense
_TW_CAP = 256                     # input lane dim: shrink first if constrained
_IN_BLOCK_BUDGET = 4 * 1024 * 1024  # ~4 MiB per input block


# ---------------------------------------------------------------------------
# Small helpers (all trace-time Python).
# ---------------------------------------------------------------------------
def _cdiv(a: int, b: int) -> int:
    return -(-a // b)


def _pick_spatial_tile(dim: int, cap: int) -> int:
    """128-multiple tile (cdiv-tiled, ragged edge handled) or full extent if small."""
    if dim >= 128:
        return min(cap, (dim // 128) * 128)
    return dim


def _largest_divisor_leq(n: int, cap: int) -> int:
    cap = max(1, min(cap, n, 8192))
    for d in range(cap, 0, -1):
        if n % d == 0:
            return d
    return 1


def _pick_lead_tile(bc: int, th: int, tw: int, nh: int, nw: int,
                    budget_bytes: int) -> int:
    plane = max(1, th * tw * 4)
    cap = max(1, budget_bytes // plane)
    if bc >= 2 and nh * nw < 2:
        # Keep >=2 blocks along the bc axis so both v7x TensorCores get work
        # even for small feature maps (14x14 / 16x16 style shapes).
        cap = min(cap, bc // 2)
    return _largest_divisor_leq(bc, cap)


def _vmem_limit_bytes(*block_bytes: int) -> int:
    needed = 2 * sum(block_bytes) + (4 << 20)    # double-buffered blocks + headroom
    return int(min(max(needed, 32 << 20), 48 << 20))


# ---------------------------------------------------------------------------
# Pass 1: per-tensor amax (max |x|), directly on the (bc, H, W) view.
# Grid: (split, bc-block, h-block, w-block).  The leading 'parallel' split axis
# shards the reduction across TensorCores; each split accumulates into its own
# (1,1,1) output block (init on its first step).  Ragged h/w edge blocks are
# masked in-kernel (only built when actually ragged).
# ---------------------------------------------------------------------------
def _compute_amax(x_flat: jax.Array, th: int, tw: int) -> jax.Array:
    bc, H, W = x_flat.shape
    nh = _cdiv(H, th)
    nw = _cdiv(W, tw)
    tbc = _pick_lead_tile(bc, th, tw, nh, nw, _IN_BLOCK_BUDGET)
    nb = bc // tbc
    nbh = _cdiv(nb, _NSPLIT)
    ragged_h = (H % th) != 0
    ragged_w = (W % tw) != 0

    def kernel(x_ref, amax_ref):
        first = ((pl.program_id(1) == 0) & (pl.program_id(2) == 0)
                 & (pl.program_id(3) == 0))

        @pl.when(first)
        def _init():
            amax_ref[...] = jnp.zeros_like(amax_ref)   # |x| >= 0, so 0 is identity

        a = jnp.abs(x_ref[...].astype(jnp.float32))
        pm = jnp.max(a, axis=0)                         # (th, tw): VPU fold over bc tile
        if ragged_h or ragged_w:                        # trace-time decision
            mask = None
            if ragged_h:
                vh = jnp.minimum(H - pl.program_id(2) * th, th)
                mask = lax.broadcasted_iota(jnp.int32, (th, tw), 0) < vh
            if ragged_w:
                vw = jnp.minimum(W - pl.program_id(3) * tw, tw)
                mw = lax.broadcasted_iota(jnp.int32, (th, tw), 1) < vw
                mask = mw if mask is None else (mask & mw)
            pm = jnp.where(mask, pm, 0.0)
        amax_ref[...] = jnp.maximum(amax_ref[...], jnp.max(pm, keepdims=True))

    def x_map(s, b, h, w):
        # Clamp so an odd block count never indexes past the array; the
        # duplicated (valid) block is harmless for a max reduction.
        return (jnp.minimum(s * nbh + b, nb - 1), h, w)

    in_block_bytes = tbc * th * tw * 4
    partials = pl.pallas_call(
        kernel,
        out_shape=jax.ShapeDtypeStruct((_NSPLIT, 1, 1), jnp.float32),
        grid_spec=pltpu.PrefetchScalarGridSpec(
            num_scalar_prefetch=0,
            grid=(_NSPLIT, nbh, nh, nw),
            in_specs=[pl.BlockSpec((tbc, th, tw), x_map)],
            out_specs=pl.BlockSpec((1, 1, 1), lambda s, b, h, w: (s, 0, 0)),
        ),
        compiler_params=pltpu.CompilerParams(
            dimension_semantics=("parallel", "arbitrary", "arbitrary", "arbitrary"),
            vmem_limit_bytes=_vmem_limit_bytes(in_block_bytes),
        ),
    )(x_flat)
    return jnp.max(partials)


# ---------------------------------------------------------------------------
# Pass 2: fake-quantize + transpose last two dims.
# scale / 1/scale arrive as (2,) SMEM scalars; per-element work is
# mul, round+clip, mul (VPU); transpose via output index_map + in-kernel
# swapaxes of the block.
# ---------------------------------------------------------------------------
def _quant_transpose_kernel(qp_ref, x_ref, o_ref):
    scale = qp_ref[0]
    inv_scale = qp_ref[1]
    x = x_ref[...].astype(jnp.float32)
    q = jnp.clip(jnp.round(x * scale), _QMIN, _QMAX)
    o_ref[...] = jnp.swapaxes(q * inv_scale, -1, -2).astype(o_ref.dtype)


def _transpose_kernel(x_ref, o_ref):
    o_ref[...] = jnp.swapaxes(x_ref[...], -1, -2)


# ---------------------------------------------------------------------------
# Public wrapper: QuantTranspose.forward
# ---------------------------------------------------------------------------
def quant_transpose(x: jax.Array, quantization: bool = True,
                    amax: jax.Array | float | None = None) -> jax.Array:
    """Pallas implementation of QuantTranspose.forward.

    x: (B, C, H, W) -> returns (B, C, W, H).
    amax: optional precomputed/calibrated per-tensor amax; if given, the
          amax pass is skipped (frozen-amax inference path).
    """
    B, C, H, W = x.shape
    bc = B * C
    x_flat = x.reshape(bc, H, W)
    itemsize = jnp.dtype(x.dtype).itemsize

    # th is the OUTPUT block's last (lane) dim -> bias it larger for lane-dense
    # stores; tw (input lane dim) gets the smaller cap.
    th = _pick_spatial_tile(H, _TH_CAP)
    tw = _pick_spatial_tile(W, _TW_CAP)
    nh = _cdiv(H, th)
    nw = _cdiv(W, tw)
    tbc = _pick_lead_tile(bc, th, tw, nh, nw, _IN_BLOCK_BUDGET)
    grid = (bc // tbc, nh, nw)

    block_bytes = tbc * th * tw * itemsize
    compiler_params = pltpu.CompilerParams(
        dimension_semantics=("parallel", "parallel", "parallel"),
        vmem_limit_bytes=_vmem_limit_bytes(block_bytes, block_bytes),
    )

    x_spec = pl.BlockSpec((tbc, th, tw), lambda b, h, w: (b, h, w))
    # Transpose expressed in the index_map: output block index (b, w, h).
    o_spec = pl.BlockSpec((tbc, tw, th), lambda b, h, w: (b, w, h))
    out_shape = jax.ShapeDtypeStruct((bc, W, H), x.dtype)

    if not quantization:
        out_flat = pl.pallas_call(
            _transpose_kernel,
            out_shape=out_shape,
            grid_spec=pltpu.PrefetchScalarGridSpec(
                num_scalar_prefetch=0, grid=grid,
                in_specs=[x_spec], out_specs=o_spec),
            compiler_params=compiler_params,
        )(x_flat)
        return out_flat.reshape(B, C, W, H)

    if amax is None:
        # TODO(synk): histogram calibration lives outside the kernel; this is
        # 'max' calibration on the current batch.
        amax_val = _compute_amax(x_flat, th, tw)
    else:
        amax_val = jnp.reshape(jnp.asarray(amax, jnp.float32), ())
    amax_val = jnp.where(amax_val > 0.0, amax_val, 1.0)   # guard all-zero input
    scale = _QMAX / amax_val
    qparams = jnp.stack([scale, 1.0 / scale]).astype(jnp.float32)  # (2,) SMEM scalars

    out_flat = pl.pallas_call(
        _quant_transpose_kernel,
        out_shape=out_shape,
        grid_spec=pltpu.PrefetchScalarGridSpec(
            num_scalar_prefetch=0, grid=grid,
            in_specs=[pl.BlockSpec(memory_space=pltpu.MemorySpace.SMEM), x_spec],
            out_specs=o_spec),
        compiler_params=compiler_params,
    )(qparams, x_flat)
    return out_flat.reshape(B, C, W, H)


def _reference(x: jnp.ndarray) -> jnp.ndarray:
    """Pure-JAX reference for the fake-quant + transpose path."""
    amax = jnp.max(jnp.abs(x))
    amax = jnp.where(amax > 0.0, amax, 1.0)
    scale = 127.0 / amax
    q = jnp.clip(jnp.round(x * scale), -128.0, 127.0)
    return jnp.swapaxes(q / scale, -1, -2)


if __name__ == "__main__":
    key = jax.random.PRNGKey(0)
    B, C, H, W = 2, 4, 16, 16
    x = jax.random.normal(key, (B, C, H, W), dtype=jnp.float32)

    out = jax.block_until_ready(quant_transpose(x, quantization=True))
    ref = _reference(x)
    assert out.shape == (B, C, W, H), out.shape
    assert jnp.allclose(out, ref, atol=1e-5, rtol=1e-5), float(
        jnp.max(jnp.abs(out - ref)))

    # Frozen / precomputed-amax path (skips pass 1).
    out_f = jax.block_until_ready(
        quant_transpose(x, quantization=True, amax=jnp.max(jnp.abs(x))))
    assert jnp.allclose(out_f, ref, atol=1e-5, rtol=1e-5), "frozen-amax path mismatch"

    # quantization=False path: pure tiled transpose.
    out_t = jax.block_until_ready(quant_transpose(x, quantization=False))
    assert out_t.shape == (B, C, W, H), out_t.shape
    assert jnp.allclose(out_t, jnp.swapaxes(x, -1, -2)), "transpose path mismatch"

    # Ragged / cdiv-tiled path: H, W >= 128 and not multiples of 128.
    x2 = jax.random.normal(jax.random.PRNGKey(1), (1, 2, 136, 130), dtype=jnp.float32)
    out2 = jax.block_until_ready(quant_transpose(x2, quantization=True))
    ref2 = _reference(x2)
    assert out2.shape == (1, 2, 130, 136), out2.shape
    assert jnp.allclose(out2, ref2, atol=1e-5, rtol=1e-5), float(
        jnp.max(jnp.abs(out2 - ref2)))

    print("KERNEL_OK")
</pallas_src>

<mosaic_0001>
module attributes {stable_mosaic.version = 11 : i64} {
  func.func @kernel(%arg0: i32, %arg1: i32, %arg2: i32, %arg3: i32, %arg4: memref<4x16x16xf32, #tpu.memory_space<vmem>>, %arg5: memref<1x1x1xf32, #tpu.memory_space<vmem>>) attributes {dimension_semantics = [#tpu.dimension_semantics<parallel>, #tpu.dimension_semantics<arbitrary>, #tpu.dimension_semantics<arbitrary>, #tpu.dimension_semantics<arbitrary>], iteration_bounds = array<i64: 2, 1, 1, 1>, scalar_prefetch = 0 : i64, scratch_operands = 0 : i64, tpu.core_type = #tpu.core_type<tc>, window_params = [{transform_indices = @transform_0, window_bounds = array<i64: 4, 16, 16>}, {transform_indices = @transform_1, window_bounds = array<i64: 1, 1, 1>}]} {
    %c0_i32 = arith.constant 0 : i32
    %0 = arith.cmpi eq, %arg1, %c0_i32 : i32
    %c0_i32_0 = arith.constant 0 : i32
    %1 = arith.cmpi eq, %arg2, %c0_i32_0 : i32
    %2 = arith.andi %0, %1 : i1
    %c0_i32_1 = arith.constant 0 : i32
    %3 = arith.cmpi eq, %arg3, %c0_i32_1 : i32
    %4 = arith.andi %2, %3 : i1
    %5 = arith.extui %4 : i1 to i32
    %c0_i32_2 = arith.constant 0 : i32
    %6 = arith.cmpi ne, %5, %c0_i32_2 : i32
    scf.if %6 {
      %cst_12 = arith.constant 0.000000e+00 : f32
      %19 = vector.broadcast %cst_12 : f32 to vector<1x1x1xf32>
      %c0_13 = arith.constant 0 : index
      %c0_14 = arith.constant 0 : index
      %c0_15 = arith.constant 0 : index
      %20 = vector.load %arg5[%c0_13, %c0_14, %c0_15] : memref<1x1x1xf32, #tpu.memory_space<vmem>>, vector<1x1x1xf32>
      tpu.vector_store %arg5[%c0_13, %c0_14, %c0_15], %19 {strides = array<i32>} : memref<1x1x1xf32, #tpu.memory_space<vmem>>, vector<1x1x1xf32>,
    } else {
    }
    %c0 = arith.constant 0 : index
    %c0_3 = arith.constant 0 : index
    %c0_4 = arith.constant 0 : index
    %7 = vector.load %arg4[%c0, %c0_3, %c0_4] : memref<4x16x16xf32, #tpu.memory_space<vmem>>, vector<4x16x16xf32>
    %8 = math.absf %7 : vector<4x16x16xf32>
    %cst = arith.constant dense<0xFF800000> : vector<16x16xf32>
    %9 = vector.multi_reduction <maximumf>, %8, %cst [0] : vector<4x16x16xf32> to vector<16x16xf32>
    %c0_5 = arith.constant 0 : index
    %c0_6 = arith.constant 0 : index
    %c0_7 = arith.constant 0 : index
    %10 = vector.load %arg5[%c0_5, %c0_6, %c0_7] : memref<1x1x1xf32, #tpu.memory_space<vmem>>, vector<1x1x1xf32>
    %11 = vector.shape_cast %9 : vector<16x16xf32> to vector<1x16x16xf32>
    %cst_8 = arith.constant dense<0xFF800000> : vector<1xf32>
    %12 = vector.multi_reduction <maximumf>, %11, %cst_8 [1, 2] : vector<1x16x16xf32> to vector<1xf32>
    %13 = vector.shape_cast %12 : vector<1xf32> to vector<1x1x1xf32>
    %14 = vector.extract %13[0, 0, 0] : f32 from vector<1x1x1xf32>
    %15 = vector.broadcast %14 : f32 to vector<1x1xf32>
    %16 = vector.shape_cast %15 : vector<1x1xf32> to vector<1x1x1xf32>
    %17 = arith.maximumf %10, %16 : vector<1x1x1xf32>
    %c0_9 = arith.constant 0 : index
    %c0_10 = arith.constant 0 : index
    %c0_11 = arith.constant 0 : index
    %18 = vector.load %arg5[%c0_9, %c0_10, %c0_11] : memref<1x1x1xf32, #tpu.memory_space<vmem>>, vector<1x1x1xf32>
    tpu.vector_store %arg5[%c0_9, %c0_10, %c0_11], %17 {strides = array<i32>} : memref<1x1x1xf32, #tpu.memory_space<vmem>>, vector<1x1x1xf32>,
    return
  }
  func.func @transform_0(%arg0: i32, %arg1: i32, %arg2: i32, %arg3: i32) -> (i32, i32, i32) {
    %c1_i32 = arith.constant 1 : i32
    %0 = arith.muli %arg0, %c1_i32 : i32
    %1 = arith.addi %0, %arg1 : i32
    %c1_i32_0 = arith.constant 1 : i32
    %2 = arith.minsi %1, %c1_i32_0 : i32
    %c0_i32 = arith.constant 0 : i32
    return %2, %arg2, %arg3 : i32, i32, i32
  }
  func.func @transform_1(%arg0: i32, %arg1: i32, %arg2: i32, %arg3: i32) -> (i32, i32, i32) {
    %c0_i32 = arith.constant 0 : i32
    %c0_i32_0 = arith.constant 0 : i32
    %c0_i32_1 = arith.constant 0 : i32
    return %arg0, %c0_i32, %c0_i32_0 : i32, i32, i32
  }
}

</mosaic_0001>

<llo_original>
// kernel: tpu_custom_call.1
$region0: #{tpu_custom_call.1}
  #allocation0 [shape = 'u32[]', space=smem, size = 0x4, offset = 0x4, fixed_abs, tag = 'smem constant byte address 0x4 - core index']
  #allocation1 [shape = 'u32[72,128]{1,0:T(1,128)}', space=vmem, size = 0x9000, scoped, tag = 'internal scratch']
  %s0 = inlined_call_operand.hbm [shape: f32[8,16,16], index: 0, kind: input, shape index: {}]
  %s1 = inlined_call_operand.vmem [shape: f32[2,1,1], index: 1, kind: output, shape index: {}]
  %s2 = sld [smem:[#allocation0]]
  $region45: #{tpu_custom_call.1} parent=0
    _
  %s4 = ssub.s32 1, %s2
  %s5 = scalar_select 0, %s4, %s2
  $region1: #{tpu_custom_call.1} parent=0
    #allocation2 [shape = 'u8[65536]{0}', space=vmem, size = 0x10000, scoped, tag = 'input window, operand 0']
    #allocation3 [shape = 's32[2]{0}', space=sflag, size = 0x8, scoped, tag = 'scoped memory for tpu_custom_call.1']
    %6 = vsyncpa [#allocation3], 0
    %s7 = scalar_lea.sflag [#allocation3], 1
    %8 = vsyncpa %s7, 0
    loop: start=0, step=1, limit=4
    $region2: #{tpu_custom_call.1} parent=1 // loop_pre_header
      _
    $region3: #{tpu_custom_call.1} parent=1 // loop_header
      %s10 = sphi 0, %s14
      %p11 = scmp.ge.s32.totalorder %s10, 4
      %s17 = sphi 0, %s43
      %s18 = sphi 0, %s39
      %s19 = sphi 0, %s35
      %s20 = sphi 0, %s31
      %s21 = sphi 0, %s17
      %s22 = sphi 0, %s18
      %s23 = sphi 0, %s19
      %s24 = sphi 0, %s20
      %s25 = sphi 0, %s21
      %s26 = sphi 0, %s22
      %s27 = sphi 0, %s23
      %s28 = sphi 0, %s24
      %s56 = sphi 0, %s58
      %s59 = sphi 0, %s56
      %s60 = sphi 0, %s59
      %s76 = sphi 0, %s60
      %s82 = sphi 0, %s84
      %s85 = sphi 0, %s82
      %s86 = sphi 0, %s85
      %s102 = sphi 0, %s86
    $region4: #{tpu_custom_call.1} parent=1 // loop_header_branch
      %13 = sbr.rel (%p11) target = $region8
    $region5: #{tpu_custom_call.1} parent=1 // loop_body
      %s15 = ssub.s32 %s10, 1
      %s16 = ssub.s32 %s10, 2
      %s29 = sadd.s32 1, %s20
      %p30 = scmp.ge.s32.totalorder %s29, 1
      %s31 = scalar_select %p30, 0, %s29
      %s32 = sadd.s32 1, %s19
      %s33 = scalar_select %p30, %s32, %s19
      %p34 = scmp.ge.s32.totalorder %s33, 1
      %s35 = scalar_select %p34, 0, %s33
      %s36 = sadd.s32 1, %s18
      %s37 = scalar_select %p34, %s36, %s18
      %p38 = scmp.ge.s32.totalorder %s37, 1
      %s39 = scalar_select %p38, 0, %s37
      %s40 = sadd.s32 1, %s17
      %s41 = scalar_select %p38, %s40, %s17
      %p42 = scmp.ge.s32.totalorder %s41, 2
      %s43 = scalar_select %p42, 0, %s41
      %s44 = sadd.s32 %s17, %s18
      %p45 = scmp.lt.s32.totalorder %s44, 1
      %s46 = scalar_select %p45, %s44, 1
      %s47 = sadd.s32 %s43, %s39
      %p48 = scmp.lt.s32.totalorder %s47, 1
      %s49 = scalar_select %p48, %s47, 1
      %s50 = ssub.s32 %s46, %s49
      %s51 = ssub.s32 %s19, %s35
      %s52 = sor.u32 %s50, %s51
      %s53 = ssub.s32 %s20, %s31
      %s54 = sor.u32 %s52, %s53
      %p55 = scmp.eq.s32.totalorder %s54, 0
      %s57 = sadd.s32 %s56, 1
      %s58 = scalar_select %p55, %s56, %s57
      %p61 = pneg %p55
      %p62 = scmp.eq.s32.totalorder %s10, 1
      %p63 = por %p61, %p62
      %p64 = scmp.ne.s32.totalorder %s56, %s59
      %p65 = scmp.eq.s32.totalorder %s10, 0
      %p66 = por %p64, %p65
      %p67 = scmp.ne.s32.totalorder %s56, %s59
      %p68 = scmp.eq.s32.totalorder %s15, 1
      %p69 = por %p67, %p68
      %p70 = scmp.ne.s32.totalorder %s59, %s60
      %p71 = scmp.eq.s32.totalorder %s15, 0
      %p72 = por %p70, %p71
      %p73 = scmp.ne.s32.totalorder %s59, %s60
      %p74 = scmp.eq.s32.totalorder %s16, 1
      %p75 = por %p73, %p74
      %p77 = scmp.ne.s32.totalorder %s60, %s76
      %p78 = scmp.eq.s32.totalorder %s16, 0
      %p79 = por %p77, %p78
      %s80 = ssub.s32 %s17, %s43
      %p81 = scmp.eq.s32.totalorder %s80, 0
      %s83 = sadd.s32 %s82, 1
      %s84 = scalar_select %p81, %s82, %s83
      %p87 = pneg %p81
      %p88 = scmp.eq.s32.totalorder %s10, 1
      %p89 = por %p87, %p88
      %p90 = scmp.ne.s32.totalorder %s82, %s85
      %p91 = scmp.eq.s32.totalorder %s10, 0
      %p92 = por %p90, %p91
      %p93 = scmp.ne.s32.totalorder %s82, %s85
      %p94 = scmp.eq.s32.totalorder %s15, 1
      %p95 = por %p93, %p94
      %p96 = scmp.ne.s32.totalorder %s85, %s86
      %p97 = scmp.eq.s32.totalorder %s15, 0
      %p98 = por %p96, %p97
      %p99 = scmp.ne.s32.totalorder %s85, %s86
      %p100 = scmp.eq.s32.totalorder %s16, 1
      %p101 = por %p99, %p100
      %p103 = scmp.ne.s32.totalorder %s86, %s102
      %p104 = scmp.eq.s32.totalorder %s16, 0
      %p105 = por %p103, %p104
      %p106 = scmp.le.s32.totalorder 1, %s10
      %p107 = scmp.lt.s32.totalorder %s10, 3
      %p108 = pnand %p106, %p107
      %p109 = pneg %p108
      // Predicated region
      $region9: #{tpu_custom_call.1} parent=5 // pred_check
        _
      $region10: #{tpu_custom_call.1} parent=5 // pred_check_branch
        %111 = sbr.rel (%p108) target = $region12
      $region11: #{tpu_custom_call.1} parent=5 // pred_region
        %s112 = ssub.s32 %s10, 1
      $region12: #{tpu_custom_call.1} parent=5 // pred_fallthru
        _
      %p113 = scmp.lt.s32.totalorder %s10, 2
      // Predicated region
      $region13: #{tpu_custom_call.1} parent=5 // pred_check
        %p114 = pneg %p113
      $region14: #{tpu_custom_call.1} parent=5 // pred_check_branch
        %116 = sbr.rel (%p114) target = $region16
      $region15: #{tpu_custom_call.1} parent=5 // pred_region
        // Predicated region
        $region17: #{tpu_custom_call.1} parent=15 // pred_check
          %p117 = pneg %p66
        $region18: #{tpu_custom_call.1} parent=15 // pred_check_branch
          %119 = sbr.rel (%p117) target = $region20
        $region19: #{tpu_custom_call.1} parent=15 // pred_region
          %s120 = sand.u32 %s56, 1
          %s121 = scalar_lea.sflag [#allocation3], %s120
          %s122 = sand.u32 %s56, 1
          %s123 = smul.addr %s122, 64
          %s124 = scalar_lea.vmem [#allocation2], %s123
          %s125 = sadd.s32 %s17, %s18
          %p126 = scmp.lt.s32.totalorder %s125, 1
          %s127 = scalar_select %p126, %s125, 1
          %s128 = smul.u32 4, %s127
          %s129 = smul.u32 2, %s19
          %131 = vsyncadd %s121, 0
          %s132 = sadd.s32 %s20, %s129
          %s133 = smul.addr %s128, 2
          %s134 = sadd.s32 %s132, %s133
          %s135 = smul.addr %s134, 8
          %s136 = scalar_lea.hbm %s0, %s135
          %s137 = sshll.u32 %s136, 4
          %s138 = int_to_ptr.hbm [resolvable:$true] %s137
          %s139 = sshll.u32 %s124, 4
          %s140 = int_to_ptr.vmem [resolvable:$true] %s139
          %145 = dma.hbm_to_vmem [thread:$0]  %s138, 1024, %s140, %s121, 128, 128, 8
        $region20: #{tpu_custom_call.1} parent=15 // pred_fallthru
          _
      $region16: #{tpu_custom_call.1} parent=5 // pred_fallthru
        _
      %p146 = scmp.le.s32.totalorder 1, %s10
      %p147 = scmp.lt.s32.totalorder %s10, 3
      %p148 = pnand %p146, %p147
      %p149 = pneg %p148
      // Predicated region
      $region21: #{tpu_custom_call.1} parent=5 // pred_check
        _
      $region22: #{tpu_custom_call.1} parent=5 // pred_check_branch
        %151 = sbr.rel (%p148) target = $region24
      $region23: #{tpu_custom_call.1} parent=5 // pred_region
        %s152 = ssub.s32 %s10, 1
        %s153 = sand.u32 %s59, 1
        %s154 = scalar_lea.sflag [#allocation3], %s153
        %s155 = sand.u32 %s59, 1
        %s156 = smul.addr %s155, 64
        %s157 = scalar_lea.vmem [#allocation2], %s156
        // Predicated region
        $region25: #{tpu_custom_call.1} parent=23 // pred_check
          %p158 = pneg %p72
        $region26: #{tpu_custom_call.1} parent=23 // pred_check_branch
          %160 = sbr.rel (%p158) target = $region28
        $region27: #{tpu_custom_call.1} parent=23 // pred_region
          %162 = dma.done %s154, 1024
        $region28: #{tpu_custom_call.1} parent=23 // pred_fallthru
          _
        %s163 = sand.u32 %s59, 1
        %s164 = scalar_lea.sflag [#allocation3], %s163
        %s165 = sand.u32 %s59, 1
        %s166 = smul.addr %s165, 64
        %s167 = scalar_lea.vmem [#allocation2], %s166
        %p168 = pneg %p72
        %p169 = pneg %p69
        %p170 = pneg %p98
        %p171 = pneg %p95
        %p172 = scmp.lt.s32.totalorder %s21, 1
        %s173 = scalar_select %p172, %s21, 1
        %s174 = scalar_lea.vmem %s1, %s173
        %s175 = sadd.s32 %s21, %s22
        %p176 = scmp.lt.s32.totalorder %s175, 1
        %s177 = scalar_select %p176, %s175, 1
        %s178 = smul.u32 4, %s177
        %s179 = smul.u32 2, %s23
        %p180 = scmp.lt.s32.totalorder %s21, 1
        %s181 = scalar_select %p180, %s21, 1
        %s182 = scalar_lea.vmem %s1, %s181
        %p183 = scmp.eq.s32.totalorder %s22, 0
        %p184 = scmp.eq.s32.totalorder %s23, 0
        %p185 = pnand %p183, %p184
        %p186 = pneg %p185
        %p187 = scmp.eq.s32.totalorder %s24, 0
        %p188 = pnand %p186, %p187
        %p189 = pneg %p188
        // Predicated region
        $region29: #{tpu_custom_call.1} parent=23 // pred_check
          _
        $region30: #{tpu_custom_call.1} parent=23 // pred_check_branch
          %191 = sbr.rel (%p188) target = $region32
        $region31: #{tpu_custom_call.1} parent=23 // pred_region
          %vm192 = vcmask 0
          %193 = vst.msk [vmem:[%s182] sm:$0x1] %vm192, 0.0
        $region32: #{tpu_custom_call.1} parent=23 // pred_fallthru
          _
        %v194 = vld [vmem:[%s157] sm:$0xff]
        %v195 = vld [vmem:[%s157 + $0x8] sm:$0xff]
        %v196 = vld [vmem:[%s157 + $0x10] sm:$0xff]
        %v197 = vld [vmem:[%s157 + $0x18] sm:$0xff]
        %v198 = vld [vmem:[%s157 + $0x20] sm:$0xff]
        %v199 = vld [vmem:[%s157 + $0x28] sm:$0xff]
        %v200 = vld [vmem:[%s157 + $0x30] sm:$0xff]
        %v201 = vld [vmem:[%s157 + $0x38] sm:$0xff]
        %v202 = vand.u32 2147483647, %v194
        %v203 = vand.u32 2147483647, %v195
        %v204 = vand.u32 2147483647, %v196
        %v205 = vand.u32 2147483647, %v197
        %v206 = vand.u32 2147483647, %v198
        %v207 = vand.u32 2147483647, %v199
        %v208 = vand.u32 2147483647, %v200
        %v209 = vand.u32 2147483647, %v201
        %vm210 = vcmask 130048
        %v211 = vsel %vm210, %v202, -inf
        %v212 = vsel %vm210, %v204, -inf
        %v213 = vsel %vm210, %v206, -inf
        %v214 = vmax.f32 %v211, %v213
        %v215 = vsel %vm210, %v208, -inf
        %v216 = vmax.f32 %v212, %v215
        %v217 = vmax.f32 %v214, %v216
        %v218 = vsel %vm210, %v203, -inf
        %v219 = vsel %vm210, %v205, -inf
        %v220 = vsel %vm210, %v207, -inf
        %v221 = vmax.f32 %v218, %v220
        %v222 = vsel %vm210, %v209, -inf
        %v223 = vmax.f32 %v219, %v222
        %v224 = vmax.f32 %v221, %v223
        %v225 = vld [vmem:[%s182] sm:$0x1]
        %v226 = vsel %vm210, %v217, -inf
        %v227 = vsel %vm210, %v224, -inf
        %v228 = vmax.f32 %v226, %v227
        %229 = vmax.xlane.f32.xlu0 %v228
        %v230 = vpop.xlane.xlu0 %229
        %v231 = vrot.slane %v230, 4
        %v232 = vmax.f32 %v230, %v231
        %v233 = vrot.slane %v232, 2
        %v234 = vmax.f32 %v232, %v233
        %v235 = vrot.slane %v234, 1
        %v236 = vmax.f32 %v234, %v235
        %s237 = vtos %v236
        %v238 = vstv %s237
        %v239 = vmax.f32 %v225, %v238
        %vm240 = vcmask 0
        %241 = vst.msk [vmem:[%s182] sm:$0x1] %vm240, %v239
        %p242 = scmp.lt.s32.totalorder %s21, 1
        %s243 = scalar_select %p242, %s21, 1
        %s244 = scalar_lea.vmem %s1, %s243
        // Predicated region
        $region33: #{tpu_custom_call.1} parent=23 // pred_check
          %p245 = pneg %p95
        $region34: #{tpu_custom_call.1} parent=23 // pred_check_branch
          %247 = sbr.rel (%p245) target = $region36
        $region35: #{tpu_custom_call.1} parent=23 // pred_region
          _
        $region36: #{tpu_custom_call.1} parent=23 // pred_fallthru
          _
      $region24: #{tpu_custom_call.1} parent=5 // pred_fallthru
        _
      %p248 = scmp.le.s32.totalorder 2, %s10
      // Predicated region
      $region37: #{tpu_custom_call.1} parent=5 // pred_check
        %p249 = pneg %p248
      $region38: #{tpu_custom_call.1} parent=5 // pred_check_branch
        %251 = sbr.rel (%p249) target = $region40
      $region39: #{tpu_custom_call.1} parent=5 // pred_region
        %s252 = ssub.s32 %s10, 2
        // Predicated region
        $region41: #{tpu_custom_call.1} parent=39 // pred_check
          %p253 = pneg %p101
        $region42: #{tpu_custom_call.1} parent=39 // pred_check_branch
          %255 = sbr.rel (%p253) target = $region44
        $region43: #{tpu_custom_call.1} parent=39 // pred_region
          %p256 = scmp.lt.s32.totalorder %s25, 1
          %s257 = scalar_select %p256, %s25, 1
          %s258 = scalar_lea.vmem %s1, %s257
        $region44: #{tpu_custom_call.1} parent=39 // pred_fallthru
          _
      $region40: #{tpu_custom_call.1} parent=5 // pred_fallthru
        _
    $region6: #{tpu_custom_call.1} parent=1 // loop_footer
      %s14 = sadd.s32 1, %s10
    $region7: #{tpu_custom_call.1} parent=1 // loop_footer_branch
      %9 = sbr.rel target = $region3
    $region8: #{tpu_custom_call.1} parent=1 // loop_exit
      _
    %259 = vsyncpa [#allocation3], 1
    %s260 = scalar_lea.sflag [#allocation3], 1
    %261 = vsyncpa %s260, 1

</llo_original>
